<compile_context>
chip_gen: v7x
topology: tpu7x:2x2x1
jax: 0.10.0
libtpu: 0.0.40
codegen_flags: <defaults>
</compile_context>

<pallas_src>
import jax
import jax.numpy as jnp
from jax.experimental import pallas as pl
from jax.experimental.pallas import tpu as pltpu


def _round_up(x, m):
    return (x + m - 1) // m * m


def _make_kernel(F_valid):
    """F_valid: number of real feature columns (Python int, not traced)."""

    def kernel(x_ref, wc_ref, bc_ref, wl_ref, bl_ref, out_ref):
        # Conv2d(1, H, (K, E)) folded into one matmul over the K*E contraction.
        h = jnp.dot(x_ref[...], wc_ref[...],
                    preferred_element_type=jnp.float32)            # (tT, Hp) f32
        h = jnp.maximum(h + bc_ref[...], 0.0).astype(jnp.bfloat16)  # ReLU

        # hidden2feature linear.
        f = jnp.dot(h, wl_ref[...],
                    preferred_element_type=jnp.float32) + bl_ref[...]   # (tT, Fp)

        # log_softmax over the valid F columns only (padded lanes masked out).
        # Only Python scalar literals below -- nothing captured from the closure.
        lane = jax.lax.broadcasted_iota(jnp.int32, f.shape, 1)
        f = jnp.where(lane < F_valid, f, -1e30)
        m = jnp.max(f, axis=-1, keepdims=True)
        lse = jnp.log(jnp.sum(jnp.exp(f - m), axis=-1, keepdims=True)) + m
        out_ref[...] = (f - lse)[:, :F_valid]

    return kernel


def prepare_params(w_conv, b_conv, w_lin, b_lin):
    """One-time weight prep: fold K taps into contraction, pad to 128 lanes, bf16."""
    H, _, K, E = w_conv.shape
    F = w_lin.shape[0]
    KE = K * E
    KEp, Hp, Fp = _round_up(KE, 128), _round_up(H, 128), _round_up(F, 128)

    # (H, 1, K, E) -> (K*E, H): row index is k*E+e, matching the im2col operand.
    wc = w_conv[:, 0].reshape(H, KE).T
    wc = jnp.pad(wc, ((0, KEp - KE), (0, Hp - H))).astype(jnp.bfloat16)
    bc = jnp.pad(b_conv, (0, Hp - H)).reshape(1, Hp).astype(jnp.float32)
    # (F, H) -> (H, F), zero-pad to (Hp, Fp)
    wl = jnp.pad(w_lin.T, ((0, Hp - H), (0, Fp - F))).astype(jnp.bfloat16)
    bl = jnp.pad(b_lin, (0, Fp - F)).reshape(1, Fp).astype(jnp.float32)

    return dict(wc=wc, bc=bc, wl=wl, bl=bl,
                K=K, E=E, H=H, F=F, KE=KE, KEp=KEp, Hp=Hp, Fp=Fp)


def cnn_forward(sample, embedding, params):
    S = int(sample.shape[0])
    K, F = params["K"], params["F"]
    KE, KEp, Hp, Fp = params["KE"], params["KEp"], params["Hp"], params["Fp"]
    T = S - K + 1

    # Window-tile size: 16-aligned (bf16 sublane packing), capped at 512.
    # When there is enough work, force >=2 grid steps so a v7x megacore can
    # shard the "parallel" axis across both TensorCores.
    tT = min(512, _round_up(T, 16))
    if T >= 32 and _round_up(T, tT) // tT < 2:
        tT = _round_up(pl.cdiv(T, 2), 16)
    T_pad = _round_up(T, tT)

    # Embedding gather + im2col packing of the K taps into the contraction dim.
    # The packed operand is tiled over T inside the kernel, so per-step VMEM is
    # O(tT) regardless of sequence length.
    embeds = jnp.take(embedding, sample, axis=0)                       # (S, E)
    idx = jnp.arange(T)[:, None] + jnp.arange(K)[None, :]              # (T, K)
    x = embeds[idx].reshape(T, KE).astype(jnp.bfloat16)                # (T, K*E)
    x = jnp.pad(x, ((0, T_pad - T), (0, KEp - KE)))                    # (T_pad, KEp)

    flops = 2 * T_pad * (KEp * Hp + Hp * Fp)
    bytes_accessed = (x.size * 2 + params["wc"].size * 2
                      + params["wl"].size * 2 + T_pad * F * 4)

    kernel = _make_kernel(F)
    out = pl.pallas_call(
        kernel,
        out_shape=jax.ShapeDtypeStruct((T_pad, F), jnp.float32),
        grid_spec=pltpu.PrefetchScalarGridSpec(
            num_scalar_prefetch=0,
            grid=(T_pad // tT,),
            in_specs=[
                pl.BlockSpec((tT, KEp), lambda i: (i, 0)),    # packed windows, tiled
                pl.BlockSpec((KEp, Hp), lambda i: (0, 0)),    # conv weight, resident
                pl.BlockSpec((1, Hp), lambda i: (0, 0)),      # conv bias
                pl.BlockSpec((Hp, Fp), lambda i: (0, 0)),     # linear weight, resident
                pl.BlockSpec((1, Fp), lambda i: (0, 0)),      # linear bias
            ],
            out_specs=pl.BlockSpec((tT, F), lambda i: (i, 0)),
        ),
        compiler_params=pltpu.CompilerParams(
            dimension_semantics=("parallel",),
            vmem_limit_bytes=48 * 1024 * 1024,   # headroom on v7x's 64 MiB/TC
        ),
        cost_estimate=pl.CostEstimate(
            flops=flops, transcendentals=T_pad * Fp,
            bytes_accessed=bytes_accessed),
    )(x, params["wc"], params["bc"], params["wl"], params["bl"])

    return out[:T]


if __name__ == "__main__":
    # small shapes consistent with the module's forward
    vocab_size = 50
    embedding_dim = 16
    hidden_dim = 32
    kernel_size = 3
    featureset_size = 8
    seq_len = 8                        # len(sample)

    key = jax.random.PRNGKey(0)
    k1, k2, k3, k4, k5, k6 = jax.random.split(key, 6)
    embedding = jax.random.normal(k1, (vocab_size, embedding_dim), jnp.float32)
    w_conv = 0.1 * jax.random.normal(
        k2, (hidden_dim, 1, kernel_size, embedding_dim), jnp.float32)
    b_conv = 0.1 * jax.random.normal(k3, (hidden_dim,), jnp.float32)
    w_lin = 0.1 * jax.random.normal(k4, (featureset_size, hidden_dim), jnp.float32)
    b_lin = 0.1 * jax.random.normal(k5, (featureset_size,), jnp.float32)
    sample = jax.random.randint(k6, (seq_len,), 0, vocab_size, jnp.int32)

    params = prepare_params(w_conv, b_conv, w_lin, b_lin)
    out = jax.block_until_ready(cnn_forward(sample, embedding, params))

    # pure-JAX f32 reference (kernel uses bf16 operands -> loose tolerance)
    T = seq_len - kernel_size + 1
    embeds = jnp.take(embedding, sample, axis=0)
    idx = jnp.arange(T)[:, None] + jnp.arange(kernel_size)[None, :]
    x_win = embeds[idx].reshape(T, kernel_size * embedding_dim)
    h_ref = jnp.maximum(x_win @ w_conv.reshape(hidden_dim, -1).T + b_conv, 0.0)
    f_ref = h_ref @ w_lin.T + b_lin
    ref = f_ref - jax.scipy.special.logsumexp(f_ref, axis=1, keepdims=True)

    assert out.shape == (T, featureset_size), out.shape
    err = float(jnp.max(jnp.abs(out - ref)))
    assert jnp.allclose(out, ref, atol=2e-2, rtol=2e-2), err
    print("KERNEL_OK")
</pallas_src>

<mosaic_0001>
module attributes {stable_mosaic.version = 11 : i64} {
  func.func @kernel(%arg0: i32, %arg1: memref<16x128xbf16, #tpu.memory_space<vmem>>, %arg2: memref<128x128xbf16, #tpu.memory_space<vmem>>, %arg3: memref<1x128xf32, #tpu.memory_space<vmem>>, %arg4: memref<128x128xbf16, #tpu.memory_space<vmem>>, %arg5: memref<1x128xf32, #tpu.memory_space<vmem>>, %arg6: memref<16x8xf32, #tpu.memory_space<vmem>>) attributes {dimension_semantics = [#tpu.dimension_semantics<parallel>], iteration_bounds = array<i64: 1>, scalar_prefetch = 0 : i64, scratch_operands = 0 : i64, tpu.core_type = #tpu.core_type<tc>, window_params = [{transform_indices = @transform_0, window_bounds = array<i64: 16, 128>}, {pipeline_mode = #tpu.pipeline_mode<synchronous>, transform_indices = @transform_1, window_bounds = array<i64: 128, 128>}, {pipeline_mode = #tpu.pipeline_mode<synchronous>, transform_indices = @transform_2, window_bounds = array<i64: 1, 128>}, {pipeline_mode = #tpu.pipeline_mode<synchronous>, transform_indices = @transform_3, window_bounds = array<i64: 128, 128>}, {pipeline_mode = #tpu.pipeline_mode<synchronous>, transform_indices = @transform_4, window_bounds = array<i64: 1, 128>}, {transform_indices = @transform_5, window_bounds = array<i64: 16, 8>}]} {
    %c0 = arith.constant 0 : index
    %c0_0 = arith.constant 0 : index
    %0 = vector.load %arg1[%c0, %c0_0] : memref<16x128xbf16, #tpu.memory_space<vmem>>, vector<16x128xbf16>
    %c0_1 = arith.constant 0 : index
    %c0_2 = arith.constant 0 : index
    %1 = vector.load %arg2[%c0_1, %c0_2] : memref<128x128xbf16, #tpu.memory_space<vmem>>, vector<128x128xbf16>
    %cst = arith.constant dense<0.000000e+00> : vector<16x128xf32>
    %2 = tpu.matmul %0, %1, %cst {dimension_numbers = #tpu.dot_dimension_numbers<[1], [0], [0], [1], [0, 0, 1, 1], [], []>} : vector<16x128xbf16>, vector<128x128xbf16>, vector<16x128xf32> -> vector<16x128xf32>
    %c0_3 = arith.constant 0 : index
    %c0_4 = arith.constant 0 : index
    %3 = vector.load %arg3[%c0_3, %c0_4] : memref<1x128xf32, #tpu.memory_space<vmem>>, vector<1x128xf32>
    %4 = vector.broadcast %3 : vector<1x128xf32> to vector<16x128xf32>
    %5 = arith.addf %2, %4 : vector<16x128xf32>
    %cst_5 = arith.constant 0.000000e+00 : f32
    %6 = vector.broadcast %cst_5 : f32 to vector<16x128xf32>
    %7 = arith.maximumf %5, %6 : vector<16x128xf32>
    %8 = arith.truncf %7 : vector<16x128xf32> to vector<16x128xbf16>
    %c0_6 = arith.constant 0 : index
    %c0_7 = arith.constant 0 : index
    %9 = vector.load %arg4[%c0_6, %c0_7] : memref<128x128xbf16, #tpu.memory_space<vmem>>, vector<128x128xbf16>
    %cst_8 = arith.constant dense<0.000000e+00> : vector<16x128xf32>
    %10 = tpu.matmul %8, %9, %cst_8 {dimension_numbers = #tpu.dot_dimension_numbers<[1], [0], [0], [1], [0, 0, 1, 1], [], []>} : vector<16x128xbf16>, vector<128x128xbf16>, vector<16x128xf32> -> vector<16x128xf32>
    %c0_9 = arith.constant 0 : index
    %c0_10 = arith.constant 0 : index
    %11 = vector.load %arg5[%c0_9, %c0_10] : memref<1x128xf32, #tpu.memory_space<vmem>>, vector<1x128xf32>
    %12 = vector.broadcast %11 : vector<1x128xf32> to vector<16x128xf32>
    %13 = arith.addf %10, %12 : vector<16x128xf32>
    %14 = tpu.iota {dimensions = array<i32: 1>} : vector<16x128xi32>
    %c8_i32 = arith.constant 8 : i32
    %15 = vector.broadcast %c8_i32 : i32 to vector<16x128xi32>
    %16 = arith.cmpi slt, %14, %15 : vector<16x128xi32>
    %cst_11 = arith.constant -1.000000e+30 : f32
    %17 = vector.broadcast %cst_11 : f32 to vector<16x128xf32>
    %18 = arith.select %16, %13, %17 : vector<16x128xi1>, vector<16x128xf32>
    %cst_12 = arith.constant dense<0xFF800000> : vector<16xf32>
    %19 = vector.multi_reduction <maximumf>, %18, %cst_12 [1] : vector<16x128xf32> to vector<16xf32>
    %20 = vector.shape_cast %19 : vector<16xf32> to vector<16x1xf32>
    %21 = vector.broadcast %20 : vector<16x1xf32> to vector<16x128xf32>
    %22 = arith.subf %18, %21 : vector<16x128xf32>
    %23 = math.exp %22 : vector<16x128xf32>
    %cst_13 = arith.constant dense<0.000000e+00> : vector<16xf32>
    %24 = vector.multi_reduction <add>, %23, %cst_13 [1] : vector<16x128xf32> to vector<16xf32>
    %25 = vector.shape_cast %24 : vector<16xf32> to vector<16x1xf32>
    %26 = math.log %25 : vector<16x1xf32>
    %27 = arith.addf %26, %20 : vector<16x1xf32>
    %28 = vector.broadcast %27 : vector<16x1xf32> to vector<16x128xf32>
    %29 = arith.subf %18, %28 : vector<16x128xf32>
    %30 = vector.extract_strided_slice %29 {offsets = [0, 0], sizes = [16, 8], strides = [1, 1]} : vector<16x128xf32> to vector<16x8xf32>
    %c0_14 = arith.constant 0 : index
    %c0_15 = arith.constant 0 : index
    %31 = vector.load %arg6[%c0_14, %c0_15] : memref<16x8xf32, #tpu.memory_space<vmem>>, vector<16x8xf32>
    tpu.vector_store %arg6[%c0_14, %c0_15], %30 {strides = array<i32>} : memref<16x8xf32, #tpu.memory_space<vmem>>, vector<16x8xf32>,
    return
  }
  func.func @transform_0(%arg0: i32) -> (i32, i32) {
    %c0_i32 = arith.constant 0 : i32
    %c0_i32_0 = arith.constant 0 : i32
    return %arg0, %c0_i32 : i32, i32
  }
  func.func @transform_1(%arg0: i32) -> (i32, i32) {
    %c0_i32 = arith.constant 0 : i32
    %c0_i32_0 = arith.constant 0 : i32
    %c0_i32_1 = arith.constant 0 : i32
    return %c0_i32, %c0_i32_0 : i32, i32
  }
  func.func @transform_2(%arg0: i32) -> (i32, i32) {
    %c0_i32 = arith.constant 0 : i32
    %c0_i32_0 = arith.constant 0 : i32
    %c0_i32_1 = arith.constant 0 : i32
    return %c0_i32, %c0_i32_0 : i32, i32
  }
  func.func @transform_3(%arg0: i32) -> (i32, i32) {
    %c0_i32 = arith.constant 0 : i32
    %c0_i32_0 = arith.constant 0 : i32
    %c0_i32_1 = arith.constant 0 : i32
    return %c0_i32, %c0_i32_0 : i32, i32
  }
  func.func @transform_4(%arg0: i32) -> (i32, i32) {
    %c0_i32 = arith.constant 0 : i32
    %c0_i32_0 = arith.constant 0 : i32
    %c0_i32_1 = arith.constant 0 : i32
    return %c0_i32, %c0_i32_0 : i32, i32
  }
  func.func @transform_5(%arg0: i32) -> (i32, i32) {
    %c0_i32 = arith.constant 0 : i32
    %c0_i32_0 = arith.constant 0 : i32
    return %arg0, %c0_i32 : i32, i32
  }
}

</mosaic_0001>

<llo_original>
// kernel: tpu_custom_call.1
$region0: #{tpu_custom_call.1}
  #allocation0 [shape = 'u32[]', space=smem, size = 0x4, offset = 0x4, fixed_abs, tag = 'smem constant byte address 0x4 - core index']
  #allocation1 [shape = 'u32[144,128]{1,0:T(1,128)}', space=vmem, size = 0x12000, scoped, tag = 'internal scratch']
  %s0 = inlined_call_operand.hbm [shape: bf16[16,128], index: 0, kind: input, shape index: {}]
  %s1 = inlined_call_operand.hbm [shape: bf16[128,128], index: 1, kind: input, shape index: {}]
  %s2 = inlined_call_operand.vmem [shape: f32[1,128], index: 2, kind: input, shape index: {}]
  %s3 = inlined_call_operand.hbm [shape: bf16[128,128], index: 3, kind: input, shape index: {}]
  %s4 = inlined_call_operand.vmem [shape: f32[1,128], index: 4, kind: input, shape index: {}]
  %s5 = inlined_call_operand.vmem [shape: f32[16,8], index: 5, kind: output, shape index: {}]
  %s6 = sld [smem:[#allocation0]]
  $region42: #{tpu_custom_call.1} parent=0
    _
  %s8 = ssub.s32 1, %s6
  %s9 = scalar_select 0, %s8, %s6
  $region1: #{tpu_custom_call.1} parent=0
    #allocation2 [shape = 'u8[4096]{0}', space=vmem, size = 0x1000, scoped, tag = 'input window, operand 0, single buffered']
    #allocation3 [shape = 's32[1]{0}', space=sflag, size = 0x4, scoped, tag = 'scoped memory for tpu_custom_call.1']
    #allocation4 [shape = 'u8[32768]{0}', space=vmem, size = 0x8000, scoped, tag = 'input window, operand 1, single buffered']
    #allocation5 [shape = 's32[1]{0}', space=sflag, size = 0x4, scoped, tag = 'scoped memory for tpu_custom_call.1']
    #allocation6 [shape = 'u8[32768]{0}', space=vmem, size = 0x8000, scoped, tag = 'input window, operand 3, single buffered']
    %10 = vsyncpa [#allocation3], 0
    %11 = vsyncpa [#allocation5], 0
    // Predicated region
    $region2: #{tpu_custom_call.1} parent=1 // pred_check
      _
    $region3: #{tpu_custom_call.1} parent=1 // pred_check_branch
      %13 = sbr.rel (0) target = $region5
    $region4: #{tpu_custom_call.1} parent=1 // pred_region
      %s15 = ssub.s32 128, 128
      %16 = vsyncadd [#allocation3], %s15
      %s17 = sshll.u32 [#allocation2], 4
      %s18 = int_to_ptr.vmem [resolvable:$true] %s17
      %23 = dma.hbm_to_vmem [thread:$0]  %s0, 128, %s18, [#allocation3], 64, 64, 4
    $region5: #{tpu_custom_call.1} parent=1 // pred_fallthru
      _
    // Predicated region
    $region6: #{tpu_custom_call.1} parent=1 // pred_check
      _
    $region7: #{tpu_custom_call.1} parent=1 // pred_check_branch
      %25 = sbr.rel (0) target = $region9
    $region8: #{tpu_custom_call.1} parent=1 // pred_region
      %s27 = ssub.s32 1024, 1024
      %28 = vsyncadd [#allocation5], %s27
      %s29 = sshll.u32 [#allocation4], 4
      %s30 = int_to_ptr.vmem [resolvable:$true] %s29
      %35 = dma.hbm_to_vmem [thread:$0]  %s1, 1024, %s30, [#allocation5], 64, 64, 4
    $region9: #{tpu_custom_call.1} parent=1 // pred_fallthru
      _
    // Predicated region
    $region10: #{tpu_custom_call.1} parent=1 // pred_check
      _
    $region11: #{tpu_custom_call.1} parent=1 // pred_check_branch
      %37 = sbr.rel (0) target = $region13
    $region12: #{tpu_custom_call.1} parent=1 // pred_region
      _
    $region13: #{tpu_custom_call.1} parent=1 // pred_fallthru
      _
    // Predicated region
    $region14: #{tpu_custom_call.1} parent=1 // pred_check
      _
    $region15: #{tpu_custom_call.1} parent=1 // pred_check_branch
      %39 = sbr.rel (0) target = $region17
    $region16: #{tpu_custom_call.1} parent=1 // pred_region
      %s41 = ssub.s32 1024, 1024
      %42 = vsyncadd [#allocation5], %s41
      %s43 = sshll.u32 [#allocation6], 4
      %s44 = int_to_ptr.vmem [resolvable:$true] %s43
      %49 = dma.hbm_to_vmem [thread:$0]  %s3, 1024, %s44, [#allocation5], 64, 64, 4
    $region17: #{tpu_custom_call.1} parent=1 // pred_fallthru
      _
    // Predicated region
    $region18: #{tpu_custom_call.1} parent=1 // pred_check
      _
    $region19: #{tpu_custom_call.1} parent=1 // pred_check_branch
      %51 = sbr.rel (0) target = $region21
    $region20: #{tpu_custom_call.1} parent=1 // pred_region
      _
    $region21: #{tpu_custom_call.1} parent=1 // pred_fallthru
      _
    // Predicated region
    $region22: #{tpu_custom_call.1} parent=1 // pred_check
      _
    $region23: #{tpu_custom_call.1} parent=1 // pred_check_branch
      %53 = sbr.rel (0) target = $region25
    $region24: #{tpu_custom_call.1} parent=1 // pred_region
      %54 = dma.done [#allocation3], 128
    $region25: #{tpu_custom_call.1} parent=1 // pred_fallthru
      _
    // Predicated region
    $region26: #{tpu_custom_call.1} parent=1 // pred_check
      _
    $region27: #{tpu_custom_call.1} parent=1 // pred_check_branch
      %56 = sbr.rel (0) target = $region29
    $region28: #{tpu_custom_call.1} parent=1 // pred_region
      %57 = dma.done [#allocation5], 1024
    $region29: #{tpu_custom_call.1} parent=1 // pred_fallthru
      _
    // Predicated region
    $region30: #{tpu_custom_call.1} parent=1 // pred_check
      _
    $region31: #{tpu_custom_call.1} parent=1 // pred_check_branch
      %59 = sbr.rel (0) target = $region33
    $region32: #{tpu_custom_call.1} parent=1 // pred_region
      %60 = dma.done [#allocation5], 1024
    $region33: #{tpu_custom_call.1} parent=1 // pred_fallthru
      _
    %v62 = vld [vmem:[#allocation2] sm:$0xf]
    %v63 = vld [vmem:[#allocation2 + $0x4] sm:$0xf]
    %v64 = vld [vmem:[#allocation4] sm:$0xf]
    %v65 = vld [vmem:[#allocation4 + $0x4] sm:$0xf]
    %v66 = vld [vmem:[#allocation4 + $0x8] sm:$0xf]
    %v67 = vld [vmem:[#allocation4 + $0xc] sm:$0xf]
    %v68 = vld [vmem:[#allocation4 + $0x10] sm:$0xf]
    %v69 = vld [vmem:[#allocation4 + $0x14] sm:$0xf]
    %v70 = vld [vmem:[#allocation4 + $0x18] sm:$0xf]
    %v71 = vld [vmem:[#allocation4 + $0x1c] sm:$0xf]
    %v72 = vld [vmem:[#allocation4 + $0x20] sm:$0xf]
    %v73 = vld [vmem:[#allocation4 + $0x24] sm:$0xf]
    %v74 = vld [vmem:[#allocation4 + $0x28] sm:$0xf]
    %v75 = vld [vmem:[#allocation4 + $0x2c] sm:$0xf]
    %v76 = vld [vmem:[#allocation4 + $0x30] sm:$0xf]
    %v77 = vld [vmem:[#allocation4 + $0x34] sm:$0xf]
    %v78 = vld [vmem:[#allocation4 + $0x38] sm:$0xf]
    %v79 = vld [vmem:[#allocation4 + $0x3c] sm:$0xf]
    %v80 = vld [vmem:[%s2] sm:$0x1]
    %v82 = vlaneseq
    %v83 = vshrl.u32 %v82, 7
    %v84 = vsub.s32 0, %v83
    %v85 = vrot.slane %v80, %v84
    %v89 = vunpack.c.l.b16 %v62
    %v90 = vunpack.c.l.b16 %v63
    %v91 = vpack.c.b16 %v90, %v89
    %v109 = vunpack.c.l.b16 %v64
    %v110 = vunpack.c.l.b16 %v65
    %v111 = vunpack.c.l.b16 %v66
    %v112 = vunpack.c.l.b16 %v67
    %v113 = vunpack.c.l.b16 %v68
    %v114 = vunpack.c.l.b16 %v69
    %v115 = vunpack.c.l.b16 %v70
    %v116 = vunpack.c.l.b16 %v71
    %v117 = vunpack.c.l.b16 %v72
    %v118 = vunpack.c.l.b16 %v73
    %v119 = vunpack.c.l.b16 %v74
    %v120 = vunpack.c.l.b16 %v75
    %v121 = vunpack.c.l.b16 %v76
    %v122 = vunpack.c.l.b16 %v77
    %v123 = vunpack.c.l.b16 %v78
    %v124 = vunpack.c.l.b16 %v79
    %v125 = vpack.c.b16 %v110, %v109
    %v126 = vpack.c.b16 %v112, %v111
    %v127 = vpack.c.b16 %v114, %v113
    %v128 = vpack.c.b16 %v116, %v115
    %v129 = vpack.c.b16 %v118, %v117
    %v130 = vpack.c.b16 %v120, %v119
    %v131 = vpack.c.b16 %v122, %v121
    %v132 = vpack.c.b16 %v124, %v123
    %141 = vmatprep.subr.bf16.mxu0 0
    %142 = vmatpush1.bf16.msra.mxu0 %v125
    %143 = vmatprep.subr.bf16.mxu0 0
    %144 = vmatpush1.bf16.msra.mxu0 %v126
    %145 = vmatprep.subr.bf16.mxu0 0
    %146 = vmatpush1.bf16.msra.mxu0 %v127
    %147 = vmatprep.subr.bf16.mxu0 0
    %148 = vmatpush1.bf16.msra.mxu0 %v128
    %149 = vmatprep.subr.bf16.mxu0 0
    %150 = vmatpush1.bf16.msra.mxu0 %v129
    %151 = vmatprep.subr.bf16.mxu0 0
    %152 = vmatpush1.bf16.msra.mxu0 %v130
    %153 = vmatprep.subr.bf16.mxu0 0
    %154 = vmatpush1.bf16.msra.mxu0 %v131
    %155 = vmatprep.subr.bf16.mxu0 0
    %156 = vmatpush1.bf16.msra.mxu0 %v132
    %157 = vmatprep.subr.bf16.mxu0 0
    %158 = vmatpush1.bf16.msra.mxu0 0
    %159 = vmatprep.subr.bf16.mxu0 0
    %160 = vmatpush1.bf16.msra.mxu0 0
    %161 = vmatprep.subr.bf16.mxu0 0
    %162 = vmatpush1.bf16.msra.mxu0 0
    %163 = vmatprep.subr.bf16.mxu0 0
    %164 = vmatpush1.bf16.msra.mxu0 0
    %165 = vmatprep.subr.bf16.mxu0 0
    %166 = vmatpush1.bf16.msra.mxu0 0
    %167 = vmatprep.subr.bf16.mxu0 0
    %168 = vmatpush1.bf16.msra.mxu0 0
    %169 = vmatprep.subr.bf16.mxu0 0
    %170 = vmatpush1.bf16.msra.mxu0 0
    %171 = vmatprep.subr.bf16.mxu0 0
    %172 = vmatpush1.bf16.msra.mxu0 0
    %173 = vmatprep.mubr.bf16.mxu0 0
    %174 = vmatmul.mubr.bf16.gmra.mrb[0].mxu0 %v91
    %v175 = vpop.f32.mrb[0].mxu0
    %v176 = vadd.f32 %v85, %v175
    %v177 = vpop.f32.mrb[0].mxu0
    %v178 = vpop.f32.mrb[0].mxu0
    %v179 = vadd.f32 %v85, %v178
    %v180 = vpop.f32.mrb[0].mxu0
    %181 = vdwg.mxu0
    %v182 = vmax.f32 %v176, 0.0
    %v183 = vmax.f32 %v179, 0.0
    %v184 = vpack.c.bf16 %v183, %v182
    %v185 = vld [vmem:[#allocation6] sm:$0xf]
    %v186 = vld [vmem:[#allocation6 + $0x4] sm:$0xf]
    %v187 = vld [vmem:[#allocation6 + $0x8] sm:$0xf]
    %v188 = vld [vmem:[#allocation6 + $0xc] sm:$0xf]
    %v189 = vld [vmem:[#allocation6 + $0x10] sm:$0xf]
    %v190 = vld [vmem:[#allocation6 + $0x14] sm:$0xf]
    %v191 = vld [vmem:[#allocation6 + $0x18] sm:$0xf]
    %v192 = vld [vmem:[#allocation6 + $0x1c] sm:$0xf]
    %v193 = vld [vmem:[#allocation6 + $0x20] sm:$0xf]
    %v194 = vld [vmem:[#allocation6 + $0x24] sm:$0xf]
    %v195 = vld [vmem:[#allocation6 + $0x28] sm:$0xf]
    %v196 = vld [vmem:[#allocation6 + $0x2c] sm:$0xf]
    %v197 = vld [vmem:[#allocation6 + $0x30] sm:$0xf]
    %v198 = vld [vmem:[#allocation6 + $0x34] sm:$0xf]
    %v199 = vld [vmem:[#allocation6 + $0x38] sm:$0xf]
    %v200 = vld [vmem:[#allocation6 + $0x3c] sm:$0xf]
    %v201 = vld [vmem:[%s4] sm:$0x1]
    %v203 = vlaneseq
    %v204 = vshrl.u32 %v203, 7
    %v205 = vsub.s32 0, %v204
    %v206 = vrot.slane %v201, %v205
    %v224 = vunpack.c.l.b16 %v185
    %v225 = vunpack.c.l.b16 %v186
    %v226 = vunpack.c.l.b16 %v187
    %v227 = vunpack.c.l.b16 %v188
    %v228 = vunpack.c.l.b16 %v189
    %v229 = vunpack.c.l.b16 %v190
    %v230 = vunpack.c.l.b16 %v191
    %v231 = vunpack.c.l.b16 %v192
    %v232 = vunpack.c.l.b16 %v193
    %v233 = vunpack.c.l.b16 %v194
    %v234 = vunpack.c.l.b16 %v195
    %v235 = vunpack.c.l.b16 %v196
    %v236 = vunpack.c.l.b16 %v197
    %v237 = vunpack.c.l.b16 %v198
    %v238 = vunpack.c.l.b16 %v199
    %v239 = vunpack.c.l.b16 %v200
    %v240 = vpack.c.b16 %v225, %v224
    %v241 = vpack.c.b16 %v227, %v226
    %v242 = vpack.c.b16 %v229, %v228
    %v243 = vpack.c.b16 %v231, %v230
    %v244 = vpack.c.b16 %v233, %v232
    %v245 = vpack.c.b16 %v235, %v234
    %v246 = vpack.c.b16 %v237, %v236
    %v247 = vpack.c.b16 %v239, %v238
    %256 = vmatprep.subr.bf16.mxu0 0
    %257 = vmatpush1.bf16.msra.mxu0 %v240
    %258 = vmatprep.subr.bf16.mxu0 0
    %259 = vmatpush1.bf16.msra.mxu0 %v241
    %260 = vmatprep.subr.bf16.mxu0 0
    %261 = vmatpush1.bf16.msra.mxu0 %v242
    %262 = vmatprep.subr.bf16.mxu0 0
    %263 = vmatpush1.bf16.msra.mxu0 %v243
    %264 = vmatprep.subr.bf16.mxu0 0
    %265 = vmatpush1.bf16.msra.mxu0 %v244
    %266 = vmatprep.subr.bf16.mxu0 0
    %267 = vmatpush1.bf16.msra.mxu0 %v245
    %268 = vmatprep.subr.bf16.mxu0 0
    %269 = vmatpush1.bf16.msra.mxu0 %v246
    %270 = vmatprep.subr.bf16.mxu0 0
    %271 = vmatpush1.bf16.msra.mxu0 %v247
    %272 = vmatprep.subr.bf16.mxu0 0
    %273 = vmatpush1.bf16.msra.mxu0 0
    %274 = vmatprep.subr.bf16.mxu0 0
    %275 = vmatpush1.bf16.msra.mxu0 0
    %276 = vmatprep.subr.bf16.mxu0 0
    %277 = vmatpush1.bf16.msra.mxu0 0
    %278 = vmatprep.subr.bf16.mxu0 0
    %279 = vmatpush1.bf16.msra.mxu0 0
    %280 = vmatprep.subr.bf16.mxu0 0
    %281 = vmatpush1.bf16.msra.mxu0 0
    %282 = vmatprep.subr.bf16.mxu0 0
    %283 = vmatpush1.bf16.msra.mxu0 0
    %284 = vmatprep.subr.bf16.mxu0 0
    %285 = vmatpush1.bf16.msra.mxu0 0
    %286 = vmatprep.subr.bf16.mxu0 0
    %287 = vmatpush1.bf16.msra.mxu0 0
    %288 = vmatprep.mubr.bf16.mxu0 0
    %289 = vmatmul.mubr.bf16.gmra.mrb[0].mxu0 %v184
    %v290 = vpop.f32.mrb[0].mxu0
    %v291 = vadd.f32 %v206, %v290
    %v292 = vpop.f32.mrb[0].mxu0
    %v293 = vpop.f32.mrb[0].mxu0
    %v294 = vadd.f32 %v206, %v293
    %v295 = vpop.f32.mrb[0].mxu0
    %296 = vdwg.mxu0
    %v297 = vlaneseq
    %v298 = vand.u32 %v297, 127
    %vm299 = vcmp.lt.s32.totalorder %v298, 8
    %v300 = vsel %vm299, %v291, -1e+30
    %v301 = vsel %vm299, %v294, -1e+30
    %302 = vmax.xlane.f32.xlu0 %v300
    %v303 = vpop.xlane.xlu0 %302
    %304 = vmax.xlane.f32.xlu0 %v301
    %v305 = vpop.xlane.xlu0 %304
    %v306 = vsub.f32 %v300, %v303
    %v307 = vsub.f32 %v301, %v305
    %v308 = vmul.f32 %v306, 1.442695
    %v309 = vpow.pop %v308
    %v310 = vmul.f32 %v307, 1.442695
    %v311 = vpow.pop %v310
    %312 = vadd.xlane.f32.xlu0 %v309
    %v313 = vpop.xlane.xlu0 %312
    %314 = vadd.xlane.f32.xlu0 %v311
    %v315 = vpop.xlane.xlu0 %314
    %v316 = vlog2.pop %v313
    %v317 = vmul.f32 %v316, 0.6931472
    %v318 = vlog2.pop %v315
    %v319 = vmul.f32 %v318, 0.6931472
    %v320 = vadd.f32 %v317, %v303
    %v321 = vadd.f32 %v319, %v305
    %v322 = vsub.f32 %v300, %v320
    %v323 = vsub.f32 %v301, %v321
    %vm324 = vcmask 64512
    %325 = vst.msk [vmem:[%s5] sm:$0xff] %vm324, %v322
    %326 = vst.msk [vmem:[%s5 + $0x8] sm:$0xff] %vm324, %v323
    // Predicated region
    $region34: #{tpu_custom_call.1} parent=1 // pred_check
      _
    $region35: #{tpu_custom_call.1} parent=1 // pred_check_branch
      %328 = sbr.rel (0) target = $region37
    $region36: #{tpu_custom_call.1} parent=1 // pred_region
      _
    $region37: #{tpu_custom_call.1} parent=1 // pred_fallthru
      _
    // Predicated region
    $region38: #{tpu_custom_call.1} parent=1 // pred_check
      _
    $region39: #{tpu_custom_call.1} parent=1 // pred_check_branch
      %330 = sbr.rel (0) target = $region41
    $region40: #{tpu_custom_call.1} parent=1 // pred_region
      _
    $region41: #{tpu_custom_call.1} parent=1 // pred_fallthru
      _
    %331 = vsyncpa [#allocation3], 1
    %332 = vsyncpa [#allocation5], 1

</llo_original>
